<compile_context>
chip_gen: v7x
topology: tpu7x:2x2x1
jax: 0.10.0
libtpu: 0.0.40
codegen_flags: <defaults>
</compile_context>

<pallas_src>
import math
from functools import partial

import jax
import jax.numpy as jnp
from jax import lax
from jax.experimental import pallas as pl
from jax.experimental.pallas import tpu as pltpu


def _round_up(a, b):
    return (a + b - 1) // b * b


def _channel_mixing_kernel(x_ref, gamma_ref, beta_ref,
                           w1_ref, b1_ref, w2_ref, b2_ref,
                           o_ref, *, eps, matmul_dtype, approximate_gelu):
    # x_ref: (TM, C) row-tile of tokens, channels on lanes.
    x = x_ref[...].astype(jnp.float32)

    # --- LayerNorm over channels (biased variance, like torch.nn.LayerNorm) ---
    mean = jnp.mean(x, axis=-1, keepdims=True)
    centered = x - mean
    var = jnp.mean(centered * centered, axis=-1, keepdims=True)
    xn = centered * lax.rsqrt(var + eps)
    res = xn * gamma_ref[...].astype(jnp.float32) + beta_ref[...].astype(jnp.float32)

    # --- Linear(C -> H): bf16 operands on the MXU fast path, f32 accumulation ---
    h = jnp.dot(res.astype(matmul_dtype), w1_ref[...],
                preferred_element_type=jnp.float32)
    h = h + b1_ref[...].astype(jnp.float32)

    # --- GELU ---
    if approximate_gelu:
        # tanh-form GELU: the transcendental lands on the EUP (own VLIW slot),
        # keeping the VALU free for the surrounding elementwise work.
        c = math.sqrt(2.0 / math.pi)
        h = 0.5 * h * (1.0 + jnp.tanh(c * (h + 0.044715 * (h * h * h))))
    else:
        # exact erf GELU (matches nn.GELU() default bit-for-bit in f32)
        h = 0.5 * h * (1.0 + lax.erf(h * (1.0 / math.sqrt(2.0))))

    # --- Linear(H -> C) ---
    y = jnp.dot(h.astype(matmul_dtype), w2_ref[...],
                preferred_element_type=jnp.float32)
    y = y + b2_ref[...].astype(jnp.float32)

    # --- residual (in f32) ---
    o_ref[...] = (y + x).astype(o_ref.dtype)


def channel_mixing_mlp(x, gamma, beta, w1, b1, w2, b2, *,
                       eps=1e-5,
                       tm=512,
                       matmul_dtype=jnp.bfloat16,
                       approximate_gelu=True,
                       vmem_limit_bytes=48 * 1024 * 1024):
    """x: (B, S, C). Returns (B, S, C) with the same dtype as x."""
    B, S, C = x.shape
    H = w1.shape[1]
    rows = B * S

    # Clamp the row tile so tiny inputs don't over-pad; keep sublane (8) alignment.
    tm = max(8, min(tm, _round_up(rows, 8)))
    rows_p = _round_up(rows, tm)          # pl.cdiv-style grid via wrapper padding
    grid = (rows_p // tm,)

    x2 = x.reshape(rows, C)
    if rows_p != rows:
        # Zero-padded rows are harmless (LayerNorm of a zero row stays finite)
        # and are sliced off after the call.
        x2 = jnp.pad(x2, ((0, rows_p - rows), (0, 0)))

    # Weights in the matmul dtype (bf16 by default): halves weight DMA/VMEM and
    # hits the rated-throughput MXU path. Small vectors stay f32.
    w1c = w1.astype(matmul_dtype)
    w2c = w2.astype(matmul_dtype)
    gamma2 = gamma.reshape(1, C).astype(jnp.float32)
    beta2 = beta.reshape(1, C).astype(jnp.float32)
    b1_2 = b1.reshape(1, H).astype(jnp.float32)
    b2_2 = b2.reshape(1, C).astype(jnp.float32)

    out = pl.pallas_call(
        partial(_channel_mixing_kernel, eps=eps,
                matmul_dtype=matmul_dtype, approximate_gelu=approximate_gelu),
        out_shape=jax.ShapeDtypeStruct((rows_p, C), x.dtype),
        grid_spec=pltpu.PrefetchScalarGridSpec(
            num_scalar_prefetch=0,
            grid=grid,
            in_specs=[
                pl.BlockSpec((tm, C), lambda i: (i, 0)),   # x row tile
                pl.BlockSpec((1, C), lambda i: (0, 0)),    # layernorm gamma
                pl.BlockSpec((1, C), lambda i: (0, 0)),    # layernorm beta
                pl.BlockSpec((C, H), lambda i: (0, 0)),    # W1 (C -> H), grid-resident
                pl.BlockSpec((1, H), lambda i: (0, 0)),    # b1
                pl.BlockSpec((H, C), lambda i: (0, 0)),    # W2 (H -> C), grid-resident
                pl.BlockSpec((1, C), lambda i: (0, 0)),    # b2
            ],
            out_specs=pl.BlockSpec((tm, C), lambda i: (i, 0)),
        ),
        compiler_params=pltpu.CompilerParams(
            dimension_semantics=("parallel",),
            vmem_limit_bytes=vmem_limit_bytes),
    )(x2, gamma2, beta2, w1c, b1_2, w2c, b2_2)

    if rows_p != rows:
        out = out[:rows]
    return out.reshape(B, S, C)


def reference_channel_mixing(x, gamma, beta, w1, b1, w2, b2, eps=1e-5):
    """Pure-JAX f32 / exact-erf reference (matches the PyTorch module)."""
    xf = x.astype(jnp.float32)
    mean = jnp.mean(xf, axis=-1, keepdims=True)
    var = jnp.mean((xf - mean) ** 2, axis=-1, keepdims=True)
    res = (xf - mean) / jnp.sqrt(var + eps) * gamma + beta
    h = res @ w1 + b1
    h = 0.5 * h * (1.0 + lax.erf(h / math.sqrt(2.0)))
    y = h @ w2 + b2
    return (y + xf).astype(x.dtype)


if __name__ == "__main__":
    # Shapes consistent with the module: tokens (B, S) with C channels per token.
    B, S, C, H = 2, 64, 128, 256

    key = jax.random.PRNGKey(0)
    kx, kw1, kb1, kw2, kb2 = jax.random.split(key, 5)

    x = jax.random.normal(kx, (B, S, C), dtype=jnp.float32)

    gamma = jnp.ones((C,), jnp.float32)
    beta = jnp.zeros((C,), jnp.float32)
    # Linear weights stored (in, out); PyTorch stores (out, in) and does x @ W.T.
    w1 = jax.random.normal(kw1, (C, H), dtype=jnp.float32) * (1.0 / math.sqrt(C))
    b1 = jax.random.normal(kb1, (H,), dtype=jnp.float32) * 0.01
    w2 = jax.random.normal(kw2, (H, C), dtype=jnp.float32) * (1.0 / math.sqrt(H))
    b2 = jax.random.normal(kb2, (C,), dtype=jnp.float32) * 0.01

    ref = reference_channel_mixing(x, gamma, beta, w1, b1, w2, b2)

    # 1) Fast path (default): bf16 matmul operands + tanh GELU -> compare with a
    #    mixed-precision tolerance against the exact f32/erf reference.
    out = channel_mixing_mlp(x, gamma, beta, w1, b1, w2, b2)
    out = jax.block_until_ready(out)
    assert out.shape == x.shape and out.dtype == x.dtype
    err_fast = float(jnp.max(jnp.abs(out.astype(jnp.float32) - ref.astype(jnp.float32))))
    assert err_fast < 1e-1, f"fast path mismatch vs reference: {err_fast}"

    # 2) Exact path (f32 matmuls + erf GELU) -> must match the reference tightly.
    out_exact = channel_mixing_mlp(x, gamma, beta, w1, b1, w2, b2,
                                   matmul_dtype=jnp.float32,
                                   approximate_gelu=False)
    out_exact = jax.block_until_ready(out_exact)
    assert jnp.allclose(out_exact, ref, atol=1e-4, rtol=1e-4), "exact path mismatch"

    # 3) Row count not divisible by the tile (exercises the cdiv/pad path).
    x_odd = jax.random.normal(kx, (2, 50, C), dtype=jnp.float32)
    ref_odd = reference_channel_mixing(x_odd, gamma, beta, w1, b1, w2, b2)
    out_odd = channel_mixing_mlp(x_odd, gamma, beta, w1, b1, w2, b2)
    out_odd = jax.block_until_ready(out_odd)
    err_odd = float(jnp.max(jnp.abs(out_odd.astype(jnp.float32) - ref_odd.astype(jnp.float32))))
    assert out_odd.shape == x_odd.shape and err_odd < 1e-1, f"padded path mismatch: {err_odd}"

    print("KERNEL_OK")
</pallas_src>

<mosaic_0001>
module attributes {stable_mosaic.version = 11 : i64} {
  func.func @_channel_mixing_kernel(%arg0: i32, %arg1: memref<128x128xf32, #tpu.memory_space<vmem>>, %arg2: memref<1x128xf32, #tpu.memory_space<vmem>>, %arg3: memref<1x128xf32, #tpu.memory_space<vmem>>, %arg4: memref<128x256xbf16, #tpu.memory_space<vmem>>, %arg5: memref<1x256xf32, #tpu.memory_space<vmem>>, %arg6: memref<256x128xbf16, #tpu.memory_space<vmem>>, %arg7: memref<1x128xf32, #tpu.memory_space<vmem>>, %arg8: memref<128x128xf32, #tpu.memory_space<vmem>>) attributes {dimension_semantics = [#tpu.dimension_semantics<parallel>], iteration_bounds = array<i64: 1>, scalar_prefetch = 0 : i64, scratch_operands = 0 : i64, tpu.core_type = #tpu.core_type<tc>, window_params = [{transform_indices = @transform_0, window_bounds = array<i64: 128, 128>}, {pipeline_mode = #tpu.pipeline_mode<synchronous>, transform_indices = @transform_1, window_bounds = array<i64: 1, 128>}, {pipeline_mode = #tpu.pipeline_mode<synchronous>, transform_indices = @transform_2, window_bounds = array<i64: 1, 128>}, {pipeline_mode = #tpu.pipeline_mode<synchronous>, transform_indices = @transform_3, window_bounds = array<i64: 128, 256>}, {pipeline_mode = #tpu.pipeline_mode<synchronous>, transform_indices = @transform_4, window_bounds = array<i64: 1, 256>}, {pipeline_mode = #tpu.pipeline_mode<synchronous>, transform_indices = @transform_5, window_bounds = array<i64: 256, 128>}, {pipeline_mode = #tpu.pipeline_mode<synchronous>, transform_indices = @transform_6, window_bounds = array<i64: 1, 128>}, {transform_indices = @transform_7, window_bounds = array<i64: 128, 128>}]} {
    %c0 = arith.constant 0 : index
    %c0_0 = arith.constant 0 : index
    %0 = vector.load %arg1[%c0, %c0_0] : memref<128x128xf32, #tpu.memory_space<vmem>>, vector<128x128xf32>
    %cst = arith.constant dense<0.000000e+00> : vector<128xf32>
    %1 = vector.multi_reduction <add>, %0, %cst [1] : vector<128x128xf32> to vector<128xf32>
    %2 = vector.shape_cast %1 : vector<128xf32> to vector<128x1xf32>
    %cst_1 = arith.constant 1.280000e+02 : f32
    %3 = vector.broadcast %cst_1 : f32 to vector<128x1xf32>
    %4 = arith.divf %2, %3 : vector<128x1xf32>
    %5 = vector.broadcast %4 : vector<128x1xf32> to vector<128x128xf32>
    %6 = arith.subf %0, %5 : vector<128x128xf32>
    %7 = arith.mulf %6, %6 : vector<128x128xf32>
    %cst_2 = arith.constant dense<0.000000e+00> : vector<128xf32>
    %8 = vector.multi_reduction <add>, %7, %cst_2 [1] : vector<128x128xf32> to vector<128xf32>
    %9 = vector.shape_cast %8 : vector<128xf32> to vector<128x1xf32>
    %cst_3 = arith.constant 1.280000e+02 : f32
    %10 = vector.broadcast %cst_3 : f32 to vector<128x1xf32>
    %11 = arith.divf %9, %10 : vector<128x1xf32>
    %cst_4 = arith.constant 9.99999974E-6 : f32
    %12 = vector.broadcast %cst_4 : f32 to vector<128x1xf32>
    %13 = arith.addf %11, %12 : vector<128x1xf32>
    %14 = math.rsqrt %13 : vector<128x1xf32>
    %15 = vector.broadcast %14 : vector<128x1xf32> to vector<128x128xf32>
    %16 = arith.mulf %6, %15 : vector<128x128xf32>
    %c0_5 = arith.constant 0 : index
    %c0_6 = arith.constant 0 : index
    %17 = vector.load %arg2[%c0_5, %c0_6] : memref<1x128xf32, #tpu.memory_space<vmem>>, vector<1x128xf32>
    %18 = vector.broadcast %17 : vector<1x128xf32> to vector<128x128xf32>
    %19 = arith.mulf %16, %18 : vector<128x128xf32>
    %c0_7 = arith.constant 0 : index
    %c0_8 = arith.constant 0 : index
    %20 = vector.load %arg3[%c0_7, %c0_8] : memref<1x128xf32, #tpu.memory_space<vmem>>, vector<1x128xf32>
    %21 = vector.broadcast %20 : vector<1x128xf32> to vector<128x128xf32>
    %22 = arith.addf %19, %21 : vector<128x128xf32>
    %23 = arith.truncf %22 : vector<128x128xf32> to vector<128x128xbf16>
    %c0_9 = arith.constant 0 : index
    %c0_10 = arith.constant 0 : index
    %24 = vector.load %arg4[%c0_9, %c0_10] : memref<128x256xbf16, #tpu.memory_space<vmem>>, vector<128x256xbf16>
    %cst_11 = arith.constant dense<0.000000e+00> : vector<128x256xf32>
    %25 = tpu.matmul %23, %24, %cst_11 {dimension_numbers = #tpu.dot_dimension_numbers<[1], [0], [0], [1], [0, 0, 1, 1], [], []>} : vector<128x128xbf16>, vector<128x256xbf16>, vector<128x256xf32> -> vector<128x256xf32>
    %c0_12 = arith.constant 0 : index
    %c0_13 = arith.constant 0 : index
    %26 = vector.load %arg5[%c0_12, %c0_13] : memref<1x256xf32, #tpu.memory_space<vmem>>, vector<1x256xf32>
    %27 = vector.broadcast %26 : vector<1x256xf32> to vector<128x256xf32>
    %28 = arith.addf %25, %27 : vector<128x256xf32>
    %cst_14 = arith.constant 5.000000e-01 : f32
    %29 = vector.broadcast %cst_14 : f32 to vector<128x256xf32>
    %30 = arith.mulf %29, %28 : vector<128x256xf32>
    %31 = arith.mulf %28, %28 : vector<128x256xf32>
    %32 = arith.mulf %31, %28 : vector<128x256xf32>
    %cst_15 = arith.constant 4.471500e-02 : f32
    %33 = vector.broadcast %cst_15 : f32 to vector<128x256xf32>
    %34 = arith.mulf %33, %32 : vector<128x256xf32>
    %35 = arith.addf %28, %34 : vector<128x256xf32>
    %cst_16 = arith.constant 0.797884583 : f32
    %36 = vector.broadcast %cst_16 : f32 to vector<128x256xf32>
    %37 = arith.mulf %36, %35 : vector<128x256xf32>
    %38 = math.tanh %37 : vector<128x256xf32>
    %cst_17 = arith.constant 1.000000e+00 : f32
    %39 = vector.broadcast %cst_17 : f32 to vector<128x256xf32>
    %40 = arith.addf %39, %38 : vector<128x256xf32>
    %41 = arith.mulf %30, %40 : vector<128x256xf32>
    %42 = arith.truncf %41 : vector<128x256xf32> to vector<128x256xbf16>
    %c0_18 = arith.constant 0 : index
    %c0_19 = arith.constant 0 : index
    %43 = vector.load %arg6[%c0_18, %c0_19] : memref<256x128xbf16, #tpu.memory_space<vmem>>, vector<256x128xbf16>
    %cst_20 = arith.constant dense<0.000000e+00> : vector<128x128xf32>
    %44 = tpu.matmul %42, %43, %cst_20 {dimension_numbers = #tpu.dot_dimension_numbers<[1], [0], [0], [1], [0, 0, 1, 1], [], []>} : vector<128x256xbf16>, vector<256x128xbf16>, vector<128x128xf32> -> vector<128x128xf32>
    %c0_21 = arith.constant 0 : index
    %c0_22 = arith.constant 0 : index
    %45 = vector.load %arg7[%c0_21, %c0_22] : memref<1x128xf32, #tpu.memory_space<vmem>>, vector<1x128xf32>
    %46 = vector.broadcast %45 : vector<1x128xf32> to vector<128x128xf32>
    %47 = arith.addf %44, %46 : vector<128x128xf32>
    %48 = arith.addf %47, %0 : vector<128x128xf32>
    %c0_23 = arith.constant 0 : index
    %c0_24 = arith.constant 0 : index
    %49 = vector.load %arg8[%c0_23, %c0_24] : memref<128x128xf32, #tpu.memory_space<vmem>>, vector<128x128xf32>
    tpu.vector_store %arg8[%c0_23, %c0_24], %48 {strides = array<i32>} : memref<128x128xf32, #tpu.memory_space<vmem>>, vector<128x128xf32>,
    return
  }
  func.func @transform_0(%arg0: i32) -> (i32, i32) {
    %c0_i32 = arith.constant 0 : i32
    %c0_i32_0 = arith.constant 0 : i32
    return %arg0, %c0_i32 : i32, i32
  }
  func.func @transform_1(%arg0: i32) -> (i32, i32) {
    %c0_i32 = arith.constant 0 : i32
    %c0_i32_0 = arith.constant 0 : i32
    %c0_i32_1 = arith.constant 0 : i32
    return %c0_i32, %c0_i32_0 : i32, i32
  }
  func.func @transform_2(%arg0: i32) -> (i32, i32) {
    %c0_i32 = arith.constant 0 : i32
    %c0_i32_0 = arith.constant 0 : i32
    %c0_i32_1 = arith.constant 0 : i32
    return %c0_i32, %c0_i32_0 : i32, i32
  }
  func.func @transform_3(%arg0: i32) -> (i32, i32) {
    %c0_i32 = arith.constant 0 : i32
    %c0_i32_0 = arith.constant 0 : i32
    %c0_i32_1 = arith.constant 0 : i32
    return %c0_i32, %c0_i32_0 : i32, i32
  }
  func.func @transform_4(%arg0: i32) -> (i32, i32) {
    %c0_i32 = arith.constant 0 : i32
    %c0_i32_0 = arith.constant 0 : i32
    %c0_i32_1 = arith.constant 0 : i32
    return %c0_i32, %c0_i32_0 : i32, i32
  }
  func.func @transform_5(%arg0: i32) -> (i32, i32) {
    %c0_i32 = arith.constant 0 : i32
    %c0_i32_0 = arith.constant 0 : i32
    %c0_i32_1 = arith.constant 0 : i32
    return %c0_i32, %c0_i32_0 : i32, i32
  }
  func.func @transform_6(%arg0: i32) -> (i32, i32) {
    %c0_i32 = arith.constant 0 : i32
    %c0_i32_0 = arith.constant 0 : i32
    %c0_i32_1 = arith.constant 0 : i32
    return %c0_i32, %c0_i32_0 : i32, i32
  }
  func.func @transform_7(%arg0: i32) -> (i32, i32) {
    %c0_i32 = arith.constant 0 : i32
    %c0_i32_0 = arith.constant 0 : i32
    return %arg0, %c0_i32 : i32, i32
  }
}

</mosaic_0001>

<llo_original>
// kernel: tpu_custom_call.1
$region0: #{tpu_custom_call.1}
  #allocation0 [shape = 'u32[]', space=smem, size = 0x4, offset = 0x4, fixed_abs, tag = 'smem constant byte address 0x4 - core index']
  #allocation1 [shape = 'u32[144,128]{1,0:T(1,128)}', space=vmem, size = 0x12000, scoped, tag = 'internal scratch']
  %s0 = inlined_call_operand.hbm [shape: f32[128,128], index: 0, kind: input, shape index: {}]
  %s1 = inlined_call_operand.vmem [shape: f32[1,128], index: 1, kind: input, shape index: {}]
  %s2 = inlined_call_operand.vmem [shape: f32[1,128], index: 2, kind: input, shape index: {}]
  %s3 = inlined_call_operand.hbm [shape: bf16[128,256], index: 3, kind: input, shape index: {}]
  %s4 = inlined_call_operand.vmem [shape: f32[1,256], index: 4, kind: input, shape index: {}]
  %s5 = inlined_call_operand.hbm [shape: bf16[256,128], index: 5, kind: input, shape index: {}]
  %s6 = inlined_call_operand.vmem [shape: f32[1,128], index: 6, kind: input, shape index: {}]
  %s7 = inlined_call_operand.hbm [shape: f32[128,128], index: 7, kind: output, shape index: {}]
  %s8 = sld [smem:[#allocation0]]
  $region50: #{tpu_custom_call.1} parent=0
    _
  %s10 = ssub.s32 1, %s8
  %s11 = scalar_select 0, %s10, %s8
  $region1: #{tpu_custom_call.1} parent=0
    #allocation2 [shape = 'u8[65536]{0}', space=vmem, size = 0x10000, scoped, tag = 'input window, operand 0, single buffered']
    #allocation3 [shape = 's32[1]{0}', space=sflag, size = 0x4, scoped, tag = 'scoped memory for tpu_custom_call.1']
    #allocation4 [shape = 's32[1]{0}', space=sflag, size = 0x4, scoped, tag = 'scoped memory for tpu_custom_call.1']
    #allocation5 [shape = 'u8[65536]{0}', space=vmem, size = 0x10000, scoped, tag = 'input window, operand 3, single buffered']
    #allocation6 [shape = 's32[1]{0}', space=sflag, size = 0x4, scoped, tag = 'scoped memory for tpu_custom_call.1']
    #allocation7 [shape = 'u8[65536]{0}', space=vmem, size = 0x10000, scoped, tag = 'input window, operand 5, single buffered']
    #allocation8 [shape = 'u8[65536]{0}', space=vmem, size = 0x10000, scoped, tag = 'output window, operand 0, single buffered']
    %12 = vsyncpa [#allocation3], 0
    %13 = vsyncpa [#allocation6], 0
    %14 = vsyncpa [#allocation4], 0
    // Predicated region
    $region2: #{tpu_custom_call.1} parent=1 // pred_check
      _
    $region3: #{tpu_custom_call.1} parent=1 // pred_check_branch
      %16 = sbr.rel (0) target = $region5
    $region4: #{tpu_custom_call.1} parent=1 // pred_region
      %s18 = ssub.s32 2048, 2048
      %19 = vsyncadd [#allocation3], %s18
      %s20 = sshll.u32 [#allocation2], 4
      %s21 = int_to_ptr.vmem [resolvable:$true] %s20
      %26 = dma.hbm_to_vmem [thread:$0]  %s0, 2048, %s21, [#allocation3], 128, 128, 8
    $region5: #{tpu_custom_call.1} parent=1 // pred_fallthru
      _
    // Predicated region
    $region6: #{tpu_custom_call.1} parent=1 // pred_check
      _
    $region7: #{tpu_custom_call.1} parent=1 // pred_check_branch
      %28 = sbr.rel (0) target = $region9
    $region8: #{tpu_custom_call.1} parent=1 // pred_region
      _
    $region9: #{tpu_custom_call.1} parent=1 // pred_fallthru
      _
    // Predicated region
    $region10: #{tpu_custom_call.1} parent=1 // pred_check
      _
    $region11: #{tpu_custom_call.1} parent=1 // pred_check_branch
      %30 = sbr.rel (0) target = $region13
    $region12: #{tpu_custom_call.1} parent=1 // pred_region
      _
    $region13: #{tpu_custom_call.1} parent=1 // pred_fallthru
      _
    // Predicated region
    $region14: #{tpu_custom_call.1} parent=1 // pred_check
      _
    $region15: #{tpu_custom_call.1} parent=1 // pred_check_branch
      %32 = sbr.rel (0) target = $region17
    $region16: #{tpu_custom_call.1} parent=1 // pred_region
      %s34 = ssub.s32 2048, 2048
      %35 = vsyncadd [#allocation6], %s34
      %s36 = sshll.u32 [#allocation5], 4
      %s37 = int_to_ptr.vmem [resolvable:$true] %s36
      %42 = dma.hbm_to_vmem [thread:$0]  %s3, 2048, %s37, [#allocation6], 128, 128, 8
    $region17: #{tpu_custom_call.1} parent=1 // pred_fallthru
      _
    // Predicated region
    $region18: #{tpu_custom_call.1} parent=1 // pred_check
      _
    $region19: #{tpu_custom_call.1} parent=1 // pred_check_branch
      %44 = sbr.rel (0) target = $region21
    $region20: #{tpu_custom_call.1} parent=1 // pred_region
      _
    $region21: #{tpu_custom_call.1} parent=1 // pred_fallthru
      _
    // Predicated region
    $region22: #{tpu_custom_call.1} parent=1 // pred_check
      _
    $region23: #{tpu_custom_call.1} parent=1 // pred_check_branch
      %46 = sbr.rel (0) target = $region25
    $region24: #{tpu_custom_call.1} parent=1 // pred_region
      %s48 = ssub.s32 2048, 2048
      %49 = vsyncadd [#allocation6], %s48
      %s50 = sshll.u32 [#allocation7], 4
      %s51 = int_to_ptr.vmem [resolvable:$true] %s50
      %56 = dma.hbm_to_vmem [thread:$0]  %s5, 2048, %s51, [#allocation6], 64, 64, 4
    $region25: #{tpu_custom_call.1} parent=1 // pred_fallthru
      _
    // Predicated region
    $region26: #{tpu_custom_call.1} parent=1 // pred_check
      _
    $region27: #{tpu_custom_call.1} parent=1 // pred_check_branch
      %58 = sbr.rel (0) target = $region29
    $region28: #{tpu_custom_call.1} parent=1 // pred_region
      _
    $region29: #{tpu_custom_call.1} parent=1 // pred_fallthru
      _
    // Predicated region
    $region30: #{tpu_custom_call.1} parent=1 // pred_check
      _
    $region31: #{tpu_custom_call.1} parent=1 // pred_check_branch
      %60 = sbr.rel (0) target = $region33
    $region32: #{tpu_custom_call.1} parent=1 // pred_region
      %61 = dma.done [#allocation3], 2048
    $region33: #{tpu_custom_call.1} parent=1 // pred_fallthru
      _
    // Predicated region
    $region34: #{tpu_custom_call.1} parent=1 // pred_check
      _
    $region35: #{tpu_custom_call.1} parent=1 // pred_check_branch
      %63 = sbr.rel (0) target = $region37
    $region36: #{tpu_custom_call.1} parent=1 // pred_region
      %64 = dma.done [#allocation6], 2048
    $region37: #{tpu_custom_call.1} parent=1 // pred_fallthru
      _
    // Predicated region
    $region38: #{tpu_custom_call.1} parent=1 // pred_check
      _
    $region39: #{tpu_custom_call.1} parent=1 // pred_check_branch
      %66 = sbr.rel (0) target = $region41
    $region40: #{tpu_custom_call.1} parent=1 // pred_region
      %67 = dma.done [#allocation6], 2048
    $region41: #{tpu_custom_call.1} parent=1 // pred_fallthru
      _
    %v69 = vld [vmem:[#allocation2] sm:$0xff]
    %v70 = vld [vmem:[#allocation2 + $0x8] sm:$0xff]
    %v71 = vld [vmem:[#allocation2 + $0x10] sm:$0xff]
    %v72 = vld [vmem:[#allocation2 + $0x18] sm:$0xff]
    %v73 = vld [vmem:[#allocation2 + $0x20] sm:$0xff]
    %v74 = vld [vmem:[#allocation2 + $0x28] sm:$0xff]
    %v75 = vld [vmem:[#allocation2 + $0x30] sm:$0xff]
    %v76 = vld [vmem:[#allocation2 + $0x38] sm:$0xff]
    %v77 = vld [vmem:[#allocation2 + $0x40] sm:$0xff]
    %v78 = vld [vmem:[#allocation2 + $0x48] sm:$0xff]
    %v79 = vld [vmem:[#allocation2 + $0x50] sm:$0xff]
    %v80 = vld [vmem:[#allocation2 + $0x58] sm:$0xff]
    %v81 = vld [vmem:[#allocation2 + $0x60] sm:$0xff]
    %v82 = vld [vmem:[#allocation2 + $0x68] sm:$0xff]
    %v83 = vld [vmem:[#allocation2 + $0x70] sm:$0xff]
    %v84 = vld [vmem:[#allocation2 + $0x78] sm:$0xff]
    %85 = vadd.xlane.f32.xlu0 %v69
    %v86 = vpop.xlane.xlu0 %85
    %87 = vadd.xlane.f32.xlu0 %v70
    %v88 = vpop.xlane.xlu0 %87
    %89 = vadd.xlane.f32.xlu0 %v71
    %v90 = vpop.xlane.xlu0 %89
    %91 = vadd.xlane.f32.xlu0 %v72
    %v92 = vpop.xlane.xlu0 %91
    %93 = vadd.xlane.f32.xlu0 %v73
    %v94 = vpop.xlane.xlu0 %93
    %95 = vadd.xlane.f32.xlu0 %v74
    %v96 = vpop.xlane.xlu0 %95
    %97 = vadd.xlane.f32.xlu0 %v75
    %v98 = vpop.xlane.xlu0 %97
    %99 = vadd.xlane.f32.xlu0 %v76
    %v100 = vpop.xlane.xlu0 %99
    %101 = vadd.xlane.f32.xlu0 %v77
    %v102 = vpop.xlane.xlu0 %101
    %103 = vadd.xlane.f32.xlu0 %v78
    %v104 = vpop.xlane.xlu0 %103
    %105 = vadd.xlane.f32.xlu0 %v79
    %v106 = vpop.xlane.xlu0 %105
    %107 = vadd.xlane.f32.xlu0 %v80
    %v108 = vpop.xlane.xlu0 %107
    %109 = vadd.xlane.f32.xlu0 %v81
    %v110 = vpop.xlane.xlu0 %109
    %111 = vadd.xlane.f32.xlu0 %v82
    %v112 = vpop.xlane.xlu0 %111
    %113 = vadd.xlane.f32.xlu0 %v83
    %v114 = vpop.xlane.xlu0 %113
    %115 = vadd.xlane.f32.xlu0 %v84
    %v116 = vpop.xlane.xlu0 %115
    %v117 = vrcp.pop 128.0
    %v118 = vmul.f32 %v86, %v117
    %v119 = vmul.f32 %v88, %v117
    %v120 = vmul.f32 %v90, %v117
    %v121 = vmul.f32 %v92, %v117
    %v122 = vmul.f32 %v94, %v117
    %v123 = vmul.f32 %v96, %v117
    %v124 = vmul.f32 %v98, %v117
    %v125 = vmul.f32 %v100, %v117
    %v126 = vmul.f32 %v102, %v117
    %v127 = vmul.f32 %v104, %v117
    %v128 = vmul.f32 %v106, %v117
    %v129 = vmul.f32 %v108, %v117
    %v130 = vmul.f32 %v110, %v117
    %v131 = vmul.f32 %v112, %v117
    %v132 = vmul.f32 %v114, %v117
    %v133 = vmul.f32 %v116, %v117
    %v134 = vsub.f32 %v69, %v118
    %v135 = vsub.f32 %v70, %v119
    %v136 = vsub.f32 %v71, %v120
    %v137 = vsub.f32 %v72, %v121
    %v138 = vsub.f32 %v73, %v122
    %v139 = vsub.f32 %v74, %v123
    %v140 = vsub.f32 %v75, %v124
    %v141 = vsub.f32 %v76, %v125
    %v142 = vsub.f32 %v77, %v126
    %v143 = vsub.f32 %v78, %v127
    %v144 = vsub.f32 %v79, %v128
    %v145 = vsub.f32 %v80, %v129
    %v146 = vsub.f32 %v81, %v130
    %v147 = vsub.f32 %v82, %v131
    %v148 = vsub.f32 %v83, %v132
    %v149 = vsub.f32 %v84, %v133
    %v150 = vmul.f32 %v134, %v134
    %v151 = vmul.f32 %v135, %v135
    %v152 = vmul.f32 %v136, %v136
    %v153 = vmul.f32 %v137, %v137
    %v154 = vmul.f32 %v138, %v138
    %v155 = vmul.f32 %v139, %v139
    %v156 = vmul.f32 %v140, %v140
    %v157 = vmul.f32 %v141, %v141
    %v158 = vmul.f32 %v142, %v142
    %v159 = vmul.f32 %v143, %v143
    %v160 = vmul.f32 %v144, %v144
    %v161 = vmul.f32 %v145, %v145
    %v162 = vmul.f32 %v146, %v146
    %v163 = vmul.f32 %v147, %v147
    %v164 = vmul.f32 %v148, %v148
    %v165 = vmul.f32 %v149, %v149
    %166 = vadd.xlane.f32.xlu0 %v150
    %v167 = vpop.xlane.xlu0 %166
    %168 = vadd.xlane.f32.xlu0 %v151
    %v169 = vpop.xlane.xlu0 %168
    %170 = vadd.xlane.f32.xlu0 %v152
    %v171 = vpop.xlane.xlu0 %170
    %172 = vadd.xlane.f32.xlu0 %v153
    %v173 = vpop.xlane.xlu0 %172
    %174 = vadd.xlane.f32.xlu0 %v154
    %v175 = vpop.xlane.xlu0 %174
    %176 = vadd.xlane.f32.xlu0 %v155
    %v177 = vpop.xlane.xlu0 %176
    %178 = vadd.xlane.f32.xlu0 %v156
    %v179 = vpop.xlane.xlu0 %178
    %180 = vadd.xlane.f32.xlu0 %v157
    %v181 = vpop.xlane.xlu0 %180
    %182 = vadd.xlane.f32.xlu0 %v158
    %v183 = vpop.xlane.xlu0 %182
    %184 = vadd.xlane.f32.xlu0 %v159
    %v185 = vpop.xlane.xlu0 %184
    %186 = vadd.xlane.f32.xlu0 %v160
    %v187 = vpop.xlane.xlu0 %186
    %188 = vadd.xlane.f32.xlu0 %v161
    %v189 = vpop.xlane.xlu0 %188
    %190 = vadd.xlane.f32.xlu0 %v162
    %v191 = vpop.xlane.xlu0 %190
    %192 = vadd.xlane.f32.xlu0 %v163
    %v193 = vpop.xlane.xlu0 %192
    %194 = vadd.xlane.f32.xlu0 %v164
    %v195 = vpop.xlane.xlu0 %194
    %196 = vadd.xlane.f32.xlu0 %v165
    %v197 = vpop.xlane.xlu0 %196
    %v198 = vmul.f32 %v167, %v117
    %v199 = vmul.f32 %v169, %v117
    %v200 = vmul.f32 %v171, %v117
    %v201 = vmul.f32 %v173, %v117
    %v202 = vmul.f32 %v175, %v117
    %v203 = vmul.f32 %v177, %v117
    %v204 = vmul.f32 %v179, %v117
    %v205 = vmul.f32 %v181, %v117
    %v206 = vmul.f32 %v183, %v117
    %v207 = vmul.f32 %v185, %v117
    %v208 = vmul.f32 %v187, %v117
    %v209 = vmul.f32 %v189, %v117
    %v210 = vmul.f32 %v191, %v117
    %v211 = vmul.f32 %v193, %v117
    %v212 = vmul.f32 %v195, %v117
    %v213 = vmul.f32 %v197, %v117
    %v214 = vadd.f32 %v198, 1e-05
    %v215 = vadd.f32 %v199, 1e-05
    %v216 = vadd.f32 %v200, 1e-05
    %v217 = vadd.f32 %v201, 1e-05
    %v218 = vadd.f32 %v202, 1e-05
    %v219 = vadd.f32 %v203, 1e-05
    %v220 = vadd.f32 %v204, 1e-05
    %v221 = vadd.f32 %v205, 1e-05
    %v222 = vadd.f32 %v206, 1e-05
    %v223 = vadd.f32 %v207, 1e-05
    %v224 = vadd.f32 %v208, 1e-05
    %v225 = vadd.f32 %v209, 1e-05
    %v226 = vadd.f32 %v210, 1e-05
    %v227 = vadd.f32 %v211, 1e-05
    %v228 = vadd.f32 %v212, 1e-05
    %v229 = vadd.f32 %v213, 1e-05
    %v230 = vrsqrt.pop %v214
    %v231 = vrsqrt.pop %v215
    %v232 = vrsqrt.pop %v216
    %v233 = vrsqrt.pop %v217
    %v234 = vrsqrt.pop %v218
    %v235 = vrsqrt.pop %v219
    %v236 = vrsqrt.pop %v220
    %v237 = vrsqrt.pop %v221
    %v238 = vrsqrt.pop %v222
    %v239 = vrsqrt.pop %v223
    %v240 = vrsqrt.pop %v224
    %v241 = vrsqrt.pop %v225
    %v242 = vrsqrt.pop %v226
    %v243 = vrsqrt.pop %v227
    %v244 = vrsqrt.pop %v228
    %v245 = vrsqrt.pop %v229
    %v246 = vmul.f32 %v134, %v230
    %v247 = vmul.f32 %v135, %v231
    %v248 = vmul.f32 %v136, %v232
    %v249 = vmul.f32 %v137, %v233
    %v250 = vmul.f32 %v138, %v234
    %v251 = vmul.f32 %v139, %v235
    %v252 = vmul.f32 %v140, %v236
    %v253 = vmul.f32 %v141, %v237
    %v254 = vmul.f32 %v142, %v238
    %v255 = vmul.f32 %v143, %v239
    %v256 = vmul.f32 %v144, %v240
    %v257 = vmul.f32 %v145, %v241
    %v258 = vmul.f32 %v146, %v242
    %v259 = vmul.f32 %v147, %v243
    %v260 = vmul.f32 %v148, %v244
    %v261 = vmul.f32 %v149, %v245
    %v262 = vld [vmem:[%s1] sm:$0x1]
    %v264 = vlaneseq
    %v265 = vshrl.u32 %v264, 7
    %v266 = vsub.s32 0, %v265
    %v267 = vrot.slane %v262, %v266
    %v269 = vmul.f32 %v246, %v267
    %v270 = vmul.f32 %v247, %v267
    %v271 = vmul.f32 %v248, %v267
    %v272 = vmul.f32 %v249, %v267
    %v273 = vmul.f32 %v250, %v267
    %v274 = vmul.f32 %v251, %v267
    %v275 = vmul.f32 %v252, %v267
    %v276 = vmul.f32 %v253, %v267
    %v277 = vmul.f32 %v254, %v267
    %v278 = vmul.f32 %v255, %v267
    %v279 = vmul.f32 %v256, %v267
    %v280 = vmul.f32 %v257, %v267
    %v281 = vmul.f32 %v258, %v267
    %v282 = vmul.f32 %v259, %v267
    %v283 = vmul.f32 %v260, %v267
    %v284 = vmul.f32 %v261, %v267
    %v285 = vld [vmem:[%s2] sm:$0x1]
    %v287 = vlaneseq
    %v288 = vshrl.u32 %v287, 7
    %v289 = vsub.s32 0, %v288
    %v290 = vrot.slane %v285, %v289
    %v292 = vadd.f32 %v269, %v290
    %v293 = vadd.f32 %v270, %v290
    %v294 = vadd.f32 %v271, %v290
    %v295 = vadd.f32 %v272, %v290
    %v296 = vadd.f32 %v273, %v290
    %v297 = vadd.f32 %v274, %v290
    %v298 = vadd.f32 %v275, %v290
    %v299 = vadd.f32 %v276, %v290
    %v300 = vadd.f32 %v277, %v290
    %v301 = vadd.f32 %v278, %v290
    %v302 = vadd.f32 %v279, %v290
    %v303 = vadd.f32 %v280, %v290
    %v304 = vadd.f32 %v281, %v290
    %v305 = vadd.f32 %v282, %v290
    %v306 = vadd.f32 %v283, %v290
    %v307 = vadd.f32 %v284, %v290
    %v308 = vpack.c.bf16 %v293, %v292
    %v309 = vpack.c.bf16 %v295, %v294
    %v310 = vpack.c.bf16 %v297, %v296
    %v311 = vpack.c.bf16 %v299, %v298
    %v312 = vpack.c.bf16 %v301, %v300
    %v313 = vpack.c.bf16 %v303, %v302
    %v314 = vpack.c.bf16 %v305, %v304
    %v315 = vpack.c.bf16 %v307, %v306
    %v316 = vld [vmem:[#allocation5] sm:$0xff]
    %v317 = vld [vmem:[#allocation5 + $0x8] sm:$0xff]
    %v318 = vld [vmem:[#allocation5 + $0x10] sm:$0xff]
    %v319 = vld [vmem:[#allocation5 + $0x18] sm:$0xff]
    %v320 = vld [vmem:[#allocation5 + $0x20] sm:$0xff]
    %v321 = vld [vmem:[#allocation5 + $0x28] sm:$0xff]
    %v322 = vld [vmem:[#allocation5 + $0x30] sm:$0xff]
    %v323 = vld [vmem:[#allocation5 + $0x38] sm:$0xff]
    %v324 = vld [vmem:[#allocation5 + $0x40] sm:$0xff]
    %v325 = vld [vmem:[#allocation5 + $0x48] sm:$0xff]
    %v326 = vld [vmem:[#allocation5 + $0x50] sm:$0xff]
    %v327 = vld [vmem:[#allocation5 + $0x58] sm:$0xff]
    %v328 = vld [vmem:[#allocation5 + $0x60] sm:$0xff]
    %v329 = vld [vmem:[#allocation5 + $0x68] sm:$0xff]
    %v330 = vld [vmem:[#allocation5 + $0x70] sm:$0xff]
    %v331 = vld [vmem:[#allocation5 + $0x78] sm:$0xff]
    %v332 = vld [vmem:[%s4] sm:$0x3]
    %v334 = vlaneseq
    %v335 = vshrl.u32 %v334, 7
    %v336 = vsub.s32 0, %v335
    %v337 = vrot.slane %v332, %v336
    %v338 = vlaneseq
    %v339 = vshrl.u32 %v338, 7
    %v340 = vsub.s32 1, %v339
    %v341 = vrot.slane %v332, %v340
    %v360 = vunpack.c.l.b16 %v316
    %v361 = vunpack.c.h.b16 %v316
    %v362 = vunpack.c.l.b16 %v317
    %v363 = vunpack.c.h.b16 %v317
    %v364 = vunpack.c.l.b16 %v318
    %v365 = vunpack.c.h.b16 %v318
    %v366 = vunpack.c.l.b16 %v319
    %v367 = vunpack.c.h.b16 %v319
    %v368 = vunpack.c.l.b16 %v320
    %v369 = vunpack.c.h.b16 %v320
    %v370 = vunpack.c.l.b16 %v321
    %v371 = vunpack.c.h.b16 %v321
    %v372 = vunpack.c.l.b16 %v322
    %v373 = vunpack.c.h.b16 %v322
    %v374 = vunpack.c.l.b16 %v323
    %v375 = vunpack.c.h.b16 %v323
    %v376 = vunpack.c.l.b16 %v324
    %v377 = vunpack.c.h.b16 %v324
    %v378 = vunpack.c.l.b16 %v325
    %v379 = vunpack.c.h.b16 %v325
    %v380 = vunpack.c.l.b16 %v326
    %v381 = vunpack.c.h.b16 %v326
    %v382 = vunpack.c.l.b16 %v327
    %v383 = vunpack.c.h.b16 %v327
    %v384 = vunpack.c.l.b16 %v328
    %v385 = vunpack.c.h.b16 %v328
    %v386 = vunpack.c.l.b16 %v329
    %v387 = vunpack.c.h.b16 %v329
    %v388 = vunpack.c.l.b16 %v330
    %v389 = vunpack.c.h.b16 %v330
    %v390 = vunpack.c.l.b16 %v331
    %v391 = vunpack.c.h.b16 %v331
    %v392 = vpack.c.b16 %v362, %v360
    %v393 = vpack.c.b16 %v363, %v361
    %v394 = vpack.c.b16 %v366, %v364
    %v395 = vpack.c.b16 %v367, %v365
    %v396 = vpack.c.b16 %v370, %v368
    %v397 = vpack.c.b16 %v371, %v369
    %v398 = vpack.c.b16 %v374, %v372
    %v399 = vpack.c.b16 %v375, %v373
    %v400 = vpack.c.b16 %v378, %v376
    %v401 = vpack.c.b16 %v379, %v377
    %v402 = vpack.c.b16 %v382, %v380
    %v403 = vpack.c.b16 %v383, %v381
    %v404 = vpack.c.b16 %v386, %v384
    %v405 = vpack.c.b16 %v387, %v385
    %v406 = vpack.c.b16 %v390, %v388
    %v407 = vpack.c.b16 %v391, %v389
    %424 = vmatprep.subr.bf16.mxu0 %v393
    %425 = vmatpush1.bf16.msra.mxu0 %v392
    %426 = vmatprep.subr.bf16.mxu0 %v395
    %427 = vmatpush1.bf16.msra.mxu0 %v394
    %428 = vmatprep.subr.bf16.mxu0 %v397
    %429 = vmatpush1.bf16.msra.mxu0 %v396
    %430 = vmatprep.subr.bf16.mxu0 %v399
    %431 = vmatpush1.bf16.msra.mxu0 %v398
    %432 = vmatprep.subr.bf16.mxu0 %v401
    %433 = vmatpush1.bf16.msra.mxu0 %v400
    %434 = vmatprep.subr.bf16.mxu0 %v403
    %435 = vmatpush1.bf16.msra.mxu0 %v402
    %436 = vmatprep.subr.bf16.mxu0 %v405
    %437 = vmatpush1.bf16.msra.mxu0 %v404
    %438 = vmatprep.subr.bf16.mxu0 %v407
    %439 = vmatpush1.bf16.msra.mxu0 %v406
    %440 = vmatprep.subr.bf16.mxu0 0
    %441 = vmatpush1.bf16.msra.mxu0 0
    %442 = vmatprep.subr.bf16.mxu0 0
    %443 = vmatpush1.bf16.msra.mxu0 0
    %444 = vmatprep.subr.bf16.mxu0 0
    %445 = vmatpush1.bf16.msra.mxu0 0
    %446 = vmatprep.subr.bf16.mxu0 0
    %447 = vmatpush1.bf16.msra.mxu0 0
    %448 = vmatprep.subr.bf16.mxu0 0
    %449 = vmatpush1.bf16.msra.mxu0 0
    %450 = vmatprep.subr.bf16.mxu0 0
    %451 = vmatpush1.bf16.msra.mxu0 0
    %452 = vmatprep.subr.bf16.mxu0 0
    %453 = vmatpush1.bf16.msra.mxu0 0
    %454 = vmatprep.subr.bf16.mxu0 0
    %455 = vmatpush1.bf16.msra.mxu0 0
    %456 = vmatprep.mubr.bf16.mxu0 0
    %457 = vmatmul.mubr.bf16.gmra.mrb[0].mxu0 %v308
    %v458 = vpop.f32.mrb[0].mxu0
    %v459 = vadd.f32 %v337, %v458
    %v460 = vpop.f32.mrb[0].mxu0
    %v461 = vadd.f32 %v341, %v460
    %v462 = vpop.f32.mrb[0].mxu0
    %v463 = vadd.f32 %v337, %v462
    %v464 = vpop.f32.mrb[0].mxu0
    %v465 = vadd.f32 %v341, %v464
    %466 = vmatprep.mubr.bf16.mxu0 0
    %467 = vmatmul.mubr.bf16.gmra.mrb[0].mxu0 %v309
    %v468 = vpop.f32.mrb[0].mxu0
    %v469 = vadd.f32 %v337, %v468
    %v470 = vpop.f32.mrb[0].mxu0
    %v471 = vadd.f32 %v341, %v470
    %v472 = vpop.f32.mrb[0].mxu0
    %v473 = vadd.f32 %v337, %v472
    %v474 = vpop.f32.mrb[0].mxu0
    %v475 = vadd.f32 %v341, %v474
    %476 = vmatprep.mubr.bf16.mxu0 0
    %477 = vmatmul.mubr.bf16.gmra.mrb[0].mxu0 %v310
    %v478 = vpop.f32.mrb[0].mxu0
    %v479 = vadd.f32 %v337, %v478
    %v480 = vpop.f32.mrb[0].mxu0
    %v481 = vadd.f32 %v341, %v480
    %v482 = vpop.f32.mrb[0].mxu0
    %v483 = vadd.f32 %v337, %v482
    %v484 = vpop.f32.mrb[0].mxu0
    %v485 = vadd.f32 %v341, %v484
    %486 = vmatprep.mubr.bf16.mxu0 0
    %487 = vmatmul.mubr.bf16.gmra.mrb[0].mxu0 %v311
    %v488 = vpop.f32.mrb[0].mxu0
    %v489 = vadd.f32 %v337, %v488
    %v490 = vpop.f32.mrb[0].mxu0
    %v491 = vadd.f32 %v341, %v490
    %v492 = vpop.f32.mrb[0].mxu0
    %v493 = vadd.f32 %v337, %v492
    %v494 = vpop.f32.mrb[0].mxu0
    %v495 = vadd.f32 %v341, %v494
    %496 = vmatprep.mubr.bf16.mxu0 0
    %497 = vmatmul.mubr.bf16.gmra.mrb[0].mxu0 %v312
    %v498 = vpop.f32.mrb[0].mxu0
    %v499 = vadd.f32 %v337, %v498
    %v500 = vpop.f32.mrb[0].mxu0
    %v501 = vadd.f32 %v341, %v500
    %v502 = vpop.f32.mrb[0].mxu0
    %v503 = vadd.f32 %v337, %v502
    %v504 = vpop.f32.mrb[0].mxu0
    %v505 = vadd.f32 %v341, %v504
    %506 = vmatprep.mubr.bf16.mxu0 0
    %507 = vmatmul.mubr.bf16.gmra.mrb[0].mxu0 %v313
    %v508 = vpop.f32.mrb[0].mxu0
    %v509 = vadd.f32 %v337, %v508
    %v510 = vpop.f32.mrb[0].mxu0
    %v511 = vadd.f32 %v341, %v510
    %v512 = vpop.f32.mrb[0].mxu0
    %v513 = vadd.f32 %v337, %v512
    %v514 = vpop.f32.mrb[0].mxu0
    %v515 = vadd.f32 %v341, %v514
    %516 = vmatprep.mubr.bf16.mxu0 0
    %517 = vmatmul.mubr.bf16.gmra.mrb[0].mxu0 %v314
    %v518 = vpop.f32.mrb[0].mxu0
    %v519 = vadd.f32 %v337, %v518
    %v520 = vpop.f32.mrb[0].mxu0
    %v521 = vadd.f32 %v341, %v520
    %v522 = vpop.f32.mrb[0].mxu0
    %v523 = vadd.f32 %v337, %v522
    %v524 = vpop.f32.mrb[0].mxu0
    %v525 = vadd.f32 %v341, %v524
    %526 = vmatprep.mubr.bf16.mxu0 0
    %527 = vmatmul.mubr.bf16.gmra.mrb[0].mxu0 %v315
    %v528 = vpop.f32.mrb[0].mxu0
    %v529 = vadd.f32 %v337, %v528
    %v530 = vpop.f32.mrb[0].mxu0
    %v531 = vadd.f32 %v341, %v530
    %v532 = vpop.f32.mrb[0].mxu0
    %v533 = vadd.f32 %v337, %v532
    %v534 = vpop.f32.mrb[0].mxu0
    %v535 = vadd.f32 %v341, %v534
    %536 = vdwg.mxu0
    %v537 = vmul.f32 %v459, 0.5
    %v538 = vmul.f32 %v461, 0.5
    %v539 = vmul.f32 %v463, 0.5
    %v540 = vmul.f32 %v465, 0.5
    %v541 = vmul.f32 %v469, 0.5
    %v542 = vmul.f32 %v471, 0.5
    %v543 = vmul.f32 %v473, 0.5
    %v544 = vmul.f32 %v475, 0.5
    %v545 = vmul.f32 %v479, 0.5
    %v546 = vmul.f32 %v481, 0.5
    %v547 = vmul.f32 %v483, 0.5
    %v548 = vmul.f32 %v485, 0.5
    %v549 = vmul.f32 %v489, 0.5
    %v550 = vmul.f32 %v491, 0.5
    %v551 = vmul.f32 %v493, 0.5
    %v552 = vmul.f32 %v495, 0.5
    %v553 = vmul.f32 %v499, 0.5
    %v554 = vmul.f32 %v501, 0.5
    %v555 = vmul.f32 %v503, 0.5
    %v556 = vmul.f32 %v505, 0.5
    %v557 = vmul.f32 %v509, 0.5
    %v558 = vmul.f32 %v511, 0.5
    %v559 = vmul.f32 %v513, 0.5
    %v560 = vmul.f32 %v515, 0.5
    %v561 = vmul.f32 %v519, 0.5
    %v562 = vmul.f32 %v521, 0.5
    %v563 = vmul.f32 %v523, 0.5
    %v564 = vmul.f32 %v525, 0.5
    %v565 = vmul.f32 %v529, 0.5
    %v566 = vmul.f32 %v531, 0.5
    %v567 = vmul.f32 %v533, 0.5
    %v568 = vmul.f32 %v535, 0.5
    %v569 = vmul.f32 %v459, %v459
    %v570 = vmul.f32 %v461, %v461
    %v571 = vmul.f32 %v463, %v463
    %v572 = vmul.f32 %v465, %v465
    %v573 = vmul.f32 %v469, %v469
    %v574 = vmul.f32 %v471, %v471
    %v575 = vmul.f32 %v473, %v473
    %v576 = vmul.f32 %v475, %v475
    %v577 = vmul.f32 %v479, %v479
    %v578 = vmul.f32 %v481, %v481
    %v579 = vmul.f32 %v483, %v483
    %v580 = vmul.f32 %v485, %v485
    %v581 = vmul.f32 %v489, %v489
    %v582 = vmul.f32 %v491, %v491
    %v583 = vmul.f32 %v493, %v493
    %v584 = vmul.f32 %v495, %v495
    %v585 = vmul.f32 %v499, %v499
    %v586 = vmul.f32 %v501, %v501
    %v587 = vmul.f32 %v503, %v503
    %v588 = vmul.f32 %v505, %v505
    %v589 = vmul.f32 %v509, %v509
    %v590 = vmul.f32 %v511, %v511
    %v591 = vmul.f32 %v513, %v513
    %v592 = vmul.f32 %v515, %v515
    %v593 = vmul.f32 %v519, %v519
    %v594 = vmul.f32 %v521, %v521
    %v595 = vmul.f32 %v523, %v523
    %v596 = vmul.f32 %v525, %v525
    %v597 = vmul.f32 %v529, %v529
    %v598 = vmul.f32 %v531, %v531
    %v599 = vmul.f32 %v533, %v533
    %v600 = vmul.f32 %v535, %v535
    %v601 = vmul.f32 %v569, %v459
    %v602 = vmul.f32 %v570, %v461
    %v603 = vmul.f32 %v571, %v463
    %v604 = vmul.f32 %v572, %v465
    %v605 = vmul.f32 %v573, %v469
    %v606 = vmul.f32 %v574, %v471
    %v607 = vmul.f32 %v575, %v473
    %v608 = vmul.f32 %v576, %v475
    %v609 = vmul.f32 %v577, %v479
    %v610 = vmul.f32 %v578, %v481
    %v611 = vmul.f32 %v579, %v483
    %v612 = vmul.f32 %v580, %v485
    %v613 = vmul.f32 %v581, %v489
    %v614 = vmul.f32 %v582, %v491
    %v615 = vmul.f32 %v583, %v493
    %v616 = vmul.f32 %v584, %v495
    %v617 = vmul.f32 %v585, %v499
    %v618 = vmul.f32 %v586, %v501
    %v619 = vmul.f32 %v587, %v503
    %v620 = vmul.f32 %v588, %v505
    %v621 = vmul.f32 %v589, %v509
    %v622 = vmul.f32 %v590, %v511
    %v623 = vmul.f32 %v591, %v513
    %v624 = vmul.f32 %v592, %v515
    %v625 = vmul.f32 %v593, %v519
    %v626 = vmul.f32 %v594, %v521
    %v627 = vmul.f32 %v595, %v523
    %v628 = vmul.f32 %v596, %v525
    %v629 = vmul.f32 %v597, %v529
    %v630 = vmul.f32 %v598, %v531
    %v631 = vmul.f32 %v599, %v533
    %v632 = vmul.f32 %v600, %v535
    %v633 = vmul.f32 %v601, 0.044715
    %v634 = vmul.f32 %v602, 0.044715
    %v635 = vmul.f32 %v603, 0.044715
    %v636 = vmul.f32 %v604, 0.044715
    %v637 = vmul.f32 %v605, 0.044715
    %v638 = vmul.f32 %v606, 0.044715
    %v639 = vmul.f32 %v607, 0.044715
    %v640 = vmul.f32 %v608, 0.044715
    %v641 = vmul.f32 %v609, 0.044715
    %v642 = vmul.f32 %v610, 0.044715
    %v643 = vmul.f32 %v611, 0.044715
    %v644 = vmul.f32 %v612, 0.044715
    %v645 = vmul.f32 %v613, 0.044715
    %v646 = vmul.f32 %v614, 0.044715
    %v647 = vmul.f32 %v615, 0.044715
    %v648 = vmul.f32 %v616, 0.044715
    %v649 = vmul.f32 %v617, 0.044715
    %v650 = vmul.f32 %v618, 0.044715
    %v651 = vmul.f32 %v619, 0.044715
    %v652 = vmul.f32 %v620, 0.044715
    %v653 = vmul.f32 %v621, 0.044715
    %v654 = vmul.f32 %v622, 0.044715
    %v655 = vmul.f32 %v623, 0.044715
    %v656 = vmul.f32 %v624, 0.044715
    %v657 = vmul.f32 %v625, 0.044715
    %v658 = vmul.f32 %v626, 0.044715
    %v659 = vmul.f32 %v627, 0.044715
    %v660 = vmul.f32 %v628, 0.044715
    %v661 = vmul.f32 %v629, 0.044715
    %v662 = vmul.f32 %v630, 0.044715
    %v663 = vmul.f32 %v631, 0.044715
    %v664 = vmul.f32 %v632, 0.044715
    %v665 = vadd.f32 %v459, %v633
    %v666 = vadd.f32 %v461, %v634
    %v667 = vadd.f32 %v463, %v635
    %v668 = vadd.f32 %v465, %v636
    %v669 = vadd.f32 %v469, %v637
    %v670 = vadd.f32 %v471, %v638
    %v671 = vadd.f32 %v473, %v639
    %v672 = vadd.f32 %v475, %v640
    %v673 = vadd.f32 %v479, %v641
    %v674 = vadd.f32 %v481, %v642
    %v675 = vadd.f32 %v483, %v643
    %v676 = vadd.f32 %v485, %v644
    %v677 = vadd.f32 %v489, %v645
    %v678 = vadd.f32 %v491, %v646
    %v679 = vadd.f32 %v493, %v647
    %v680 = vadd.f32 %v495, %v648
    %v681 = vadd.f32 %v499, %v649
    %v682 = vadd.f32 %v501, %v650
    %v683 = vadd.f32 %v503, %v651
    %v684 = vadd.f32 %v505, %v652
    %v685 = vadd.f32 %v509, %v653
    %v686 = vadd.f32 %v511, %v654
    %v687 = vadd.f32 %v513, %v655
    %v688 = vadd.f32 %v515, %v656
    %v689 = vadd.f32 %v519, %v657
    %v690 = vadd.f32 %v521, %v658
    %v691 = vadd.f32 %v523, %v659
    %v692 = vadd.f32 %v525, %v660
    %v693 = vadd.f32 %v529, %v661
    %v694 = vadd.f32 %v531, %v662
    %v695 = vadd.f32 %v533, %v663
    %v696 = vadd.f32 %v535, %v664
    %v697 = vmul.f32 %v665, 0.7978846
    %v698 = vmul.f32 %v666, 0.7978846
    %v699 = vmul.f32 %v667, 0.7978846
    %v700 = vmul.f32 %v668, 0.7978846
    %v701 = vmul.f32 %v669, 0.7978846
    %v702 = vmul.f32 %v670, 0.7978846
    %v703 = vmul.f32 %v671, 0.7978846
    %v704 = vmul.f32 %v672, 0.7978846
    %v705 = vmul.f32 %v673, 0.7978846
    %v706 = vmul.f32 %v674, 0.7978846
    %v707 = vmul.f32 %v675, 0.7978846
    %v708 = vmul.f32 %v676, 0.7978846
    %v709 = vmul.f32 %v677, 0.7978846
    %v710 = vmul.f32 %v678, 0.7978846
    %v711 = vmul.f32 %v679, 0.7978846
    %v712 = vmul.f32 %v680, 0.7978846
    %v713 = vmul.f32 %v681, 0.7978846
    %v714 = vmul.f32 %v682, 0.7978846
    %v715 = vmul.f32 %v683, 0.7978846
    %v716 = vmul.f32 %v684, 0.7978846
    %v717 = vmul.f32 %v685, 0.7978846
    %v718 = vmul.f32 %v686, 0.7978846
    %v719 = vmul.f32 %v687, 0.7978846
    %v720 = vmul.f32 %v688, 0.7978846
    %v721 = vmul.f32 %v689, 0.7978846
    %v722 = vmul.f32 %v690, 0.7978846
    %v723 = vmul.f32 %v691, 0.7978846
    %v724 = vmul.f32 %v692, 0.7978846
    %v725 = vmul.f32 %v693, 0.7978846
    %v726 = vmul.f32 %v694, 0.7978846
    %v727 = vmul.f32 %v695, 0.7978846
    %v728 = vmul.f32 %v696, 0.7978846
    %v729 = vtanh.pop %v697
    %v730 = vtanh.pop %v698
    %v731 = vtanh.pop %v699
    %v732 = vtanh.pop %v700
    %v733 = vtanh.pop %v701
    %v734 = vtanh.pop %v702
    %v735 = vtanh.pop %v703
    %v736 = vtanh.pop %v704
    %v737 = vtanh.pop %v705
    %v738 = vtanh.pop %v706
    %v739 = vtanh.pop %v707
    %v740 = vtanh.pop %v708
    %v741 = vtanh.pop %v709
    %v742 = vtanh.pop %v710
    %v743 = vtanh.pop %v711
    %v744 = vtanh.pop %v712
    %v745 = vtanh.pop %v713
    %v746 = vtanh.pop %v714
    %v747 = vtanh.pop %v715
    %v748 = vtanh.pop %v716
    %v749 = vtanh.pop %v717
    %v750 = vtanh.pop %v718
    %v751 = vtanh.pop %v719
    %v752 = vtanh.pop %v720
    %v753 = vtanh.pop %v721
    %v754 = vtanh.pop %v722
    %v755 = vtanh.pop %v723
    %v756 = vtanh.pop %v724
    %v757 = vtanh.pop %v725
    %v758 = vtanh.pop %v726
    %v759 = vtanh.pop %v727
    %v760 = vtanh.pop %v728
    %v761 = vadd.f32 %v729, 1.0
    %v762 = vadd.f32 %v730, 1.0
    %v763 = vadd.f32 %v731, 1.0
    %v764 = vadd.f32 %v732, 1.0
    %v765 = vadd.f32 %v733, 1.0
    %v766 = vadd.f32 %v734, 1.0
    %v767 = vadd.f32 %v735, 1.0
    %v768 = vadd.f32 %v736, 1.0
    %v769 = vadd.f32 %v737, 1.0
    %v770 = vadd.f32 %v738, 1.0
    %v771 = vadd.f32 %v739, 1.0
    %v772 = vadd.f32 %v740, 1.0
    %v773 = vadd.f32 %v741, 1.0
    %v774 = vadd.f32 %v742, 1.0
    %v775 = vadd.f32 %v743, 1.0
    %v776 = vadd.f32 %v744, 1.0
    %v777 = vadd.f32 %v745, 1.0
    %v778 = vadd.f32 %v746, 1.0
    %v779 = vadd.f32 %v747, 1.0
    %v780 = vadd.f32 %v748, 1.0
    %v781 = vadd.f32 %v749, 1.0
    %v782 = vadd.f32 %v750, 1.0
    %v783 = vadd.f32 %v751, 1.0
    %v784 = vadd.f32 %v752, 1.0
    %v785 = vadd.f32 %v753, 1.0
    %v786 = vadd.f32 %v754, 1.0
    %v787 = vadd.f32 %v755, 1.0
    %v788 = vadd.f32 %v756, 1.0
    %v789 = vadd.f32 %v757, 1.0
    %v790 = vadd.f32 %v758, 1.0
    %v791 = vadd.f32 %v759, 1.0
    %v792 = vadd.f32 %v760, 1.0
    %v793 = vmul.f32 %v537, %v761
    %v794 = vmul.f32 %v538, %v762
    %v795 = vmul.f32 %v539, %v763
    %v796 = vmul.f32 %v540, %v764
    %v797 = vmul.f32 %v541, %v765
    %v798 = vmul.f32 %v542, %v766
    %v799 = vmul.f32 %v543, %v767
    %v800 = vmul.f32 %v544, %v768
    %v801 = vmul.f32 %v545, %v769
    %v802 = vmul.f32 %v546, %v770
    %v803 = vmul.f32 %v547, %v771
    %v804 = vmul.f32 %v548, %v772
    %v805 = vmul.f32 %v549, %v773
    %v806 = vmul.f32 %v550, %v774
    %v807 = vmul.f32 %v551, %v775
    %v808 = vmul.f32 %v552, %v776
    %v809 = vmul.f32 %v553, %v777
    %v810 = vmul.f32 %v554, %v778
    %v811 = vmul.f32 %v555, %v779
    %v812 = vmul.f32 %v556, %v780
    %v813 = vmul.f32 %v557, %v781
    %v814 = vmul.f32 %v558, %v782
    %v815 = vmul.f32 %v559, %v783
    %v816 = vmul.f32 %v560, %v784
    %v817 = vmul.f32 %v561, %v785
    %v818 = vmul.f32 %v562, %v786
    %v819 = vmul.f32 %v563, %v787
    %v820 = vmul.f32 %v564, %v788
    %v821 = vmul.f32 %v565, %v789
    %v822 = vmul.f32 %v566, %v790
    %v823 = vmul.f32 %v567, %v791
    %v824 = vmul.f32 %v568, %v792
    %v825 = vpack.c.bf16 %v795, %v793
    %v826 = vpack.c.bf16 %v796, %v794
    %v827 = vpack.c.bf16 %v799, %v797
    %v828 = vpack.c.bf16 %v800, %v798
    %v829 = vpack.c.bf16 %v803, %v801
    %v830 = vpack.c.bf16 %v804, %v802
    %v831 = vpack.c.bf16 %v807, %v805
    %v832 = vpack.c.bf16 %v808, %v806
    %v833 = vpack.c.bf16 %v811, %v809
    %v834 = vpack.c.bf16 %v812, %v810
    %v835 = vpack.c.bf16 %v815, %v813
    %v836 = vpack.c.bf16 %v816, %v814
    %v837 = vpack.c.bf16 %v819, %v817
    %v838 = vpack.c.bf16 %v820, %v818
    %v839 = vpack.c.bf16 %v823, %v821
    %v840 = vpack.c.bf16 %v824, %v822
    %v841 = vld [vmem:[#allocation7] sm:$0xf]
    %v842 = vld [vmem:[#allocation7 + $0x4] sm:$0xf]
    %v843 = vld [vmem:[#allocation7 + $0x8] sm:$0xf]
    %v844 = vld [vmem:[#allocation7 + $0xc] sm:$0xf]
    %v845 = vld [vmem:[#allocation7 + $0x10] sm:$0xf]
    %v846 = vld [vmem:[#allocation7 + $0x14] sm:$0xf]
    %v847 = vld [vmem:[#allocation7 + $0x18] sm:$0xf]
    %v848 = vld [vmem:[#allocation7 + $0x1c] sm:$0xf]
    %v849 = vld [vmem:[#allocation7 + $0x20] sm:$0xf]
    %v850 = vld [vmem:[#allocation7 + $0x24] sm:$0xf]
    %v851 = vld [vmem:[#allocation7 + $0x28] sm:$0xf]
    %v852 = vld [vmem:[#allocation7 + $0x2c] sm:$0xf]
    %v853 = vld [vmem:[#allocation7 + $0x30] sm:$0xf]
    %v854 = vld [vmem:[#allocation7 + $0x34] sm:$0xf]
    %v855 = vld [vmem:[#allocation7 + $0x38] sm:$0xf]
    %v856 = vld [vmem:[#allocation7 + $0x3c] sm:$0xf]
    %v857 = vld [vmem:[#allocation7 + $0x40] sm:$0xf]
    %v858 = vld [vmem:[#allocation7 + $0x44] sm:$0xf]
    %v859 = vld [vmem:[#allocation7 + $0x48] sm:$0xf]
    %v860 = vld [vmem:[#allocation7 + $0x4c] sm:$0xf]
    %v861 = vld [vmem:[#allocation7 + $0x50] sm:$0xf]
    %v862 = vld [vmem:[#allocation7 + $0x54] sm:$0xf]
    %v863 = vld [vmem:[#allocation7 + $0x58] sm:$0xf]
    %v864 = vld [vmem:[#allocation7 + $0x5c] sm:$0xf]
    %v865 = vld [vmem:[#allocation7 + $0x60] sm:$0xf]
    %v866 = vld [vmem:[#allocation7 + $0x64] sm:$0xf]
    %v867 = vld [vmem:[#allocation7 + $0x68] sm:$0xf]
    %v868 = vld [vmem:[#allocation7 + $0x6c] sm:$0xf]
    %v869 = vld [vmem:[#allocation7 + $0x70] sm:$0xf]
    %v870 = vld [vmem:[#allocation7 + $0x74] sm:$0xf]
    %v871 = vld [vmem:[#allocation7 + $0x78] sm:$0xf]
    %v872 = vld [vmem:[#allocation7 + $0x7c] sm:$0xf]
    %v873 = vld [vmem:[%s6] sm:$0x1]
    %v875 = vlaneseq
    %v876 = vshrl.u32 %v875, 7
    %v877 = vsub.s32 0, %v876
    %v878 = vrot.slane %v873, %v877
    %v912 = vunpack.c.l.b16 %v841
    %v913 = vunpack.c.l.b16 %v842
    %v914 = vunpack.c.l.b16 %v843
    %v915 = vunpack.c.l.b16 %v844
    %v916 = vunpack.c.l.b16 %v845
    %v917 = vunpack.c.l.b16 %v846
    %v918 = vunpack.c.l.b16 %v847
    %v919 = vunpack.c.l.b16 %v848
    %v920 = vunpack.c.l.b16 %v849
    %v921 = vunpack.c.l.b16 %v850
    %v922 = vunpack.c.l.b16 %v851
    %v923 = vunpack.c.l.b16 %v852
    %v924 = vunpack.c.l.b16 %v853
    %v925 = vunpack.c.l.b16 %v854
    %v926 = vunpack.c.l.b16 %v855
    %v927 = vunpack.c.l.b16 %v856
    %v928 = vunpack.c.l.b16 %v857
    %v929 = vunpack.c.l.b16 %v858
    %v930 = vunpack.c.l.b16 %v859
    %v931 = vunpack.c.l.b16 %v860
    %v932 = vunpack.c.l.b16 %v861
    %v933 = vunpack.c.l.b16 %v862
    %v934 = vunpack.c.l.b16 %v863
    %v935 = vunpack.c.l.b16 %v864
    %v936 = vunpack.c.l.b16 %v865
    %v937 = vunpack.c.l.b16 %v866
    %v938 = vunpack.c.l.b16 %v867
    %v939 = vunpack.c.l.b16 %v868
    %v940 = vunpack.c.l.b16 %v869
    %v941 = vunpack.c.l.b16 %v870
    %v942 = vunpack.c.l.b16 %v871
    %v943 = vunpack.c.l.b16 %v872
    %v944 = vpack.c.b16 %v913, %v912
    %v945 = vpack.c.b16 %v915, %v914
    %v946 = vpack.c.b16 %v917, %v916
    %v947 = vpack.c.b16 %v919, %v918
    %v948 = vpack.c.b16 %v921, %v920
    %v949 = vpack.c.b16 %v923, %v922
    %v950 = vpack.c.b16 %v925, %v924
    %v951 = vpack.c.b16 %v927, %v926
    %v952 = vpack.c.b16 %v929, %v928
    %v953 = vpack.c.b16 %v931, %v930
    %v954 = vpack.c.b16 %v933, %v932
    %v955 = vpack.c.b16 %v935, %v934
    %v956 = vpack.c.b16 %v937, %v936
    %v957 = vpack.c.b16 %v939, %v938
    %v958 = vpack.c.b16 %v941, %v940
    %v959 = vpack.c.b16 %v943, %v942
    %976 = vmatprep.subr.bf16.mxu0 0
    %977 = vmatpush1.bf16.msra.mxu0 %v944
    %978 = vmatprep.subr.bf16.mxu0 0
    %979 = vmatpush1.bf16.msra.mxu0 %v945
    %980 = vmatprep.subr.bf16.mxu0 0
    %981 = vmatpush1.bf16.msra.mxu0 %v946
    %982 = vmatprep.subr.bf16.mxu0 0
    %983 = vmatpush1.bf16.msra.mxu0 %v947
    %984 = vmatprep.subr.bf16.mxu0 0
    %985 = vmatpush1.bf16.msra.mxu0 %v948
    %986 = vmatprep.subr.bf16.mxu0 0
    %987 = vmatpush1.bf16.msra.mxu0 %v949
    %988 = vmatprep.subr.bf16.mxu0 0
    %989 = vmatpush1.bf16.msra.mxu0 %v950
    %990 = vmatprep.subr.bf16.mxu0 0
    %991 = vmatpush1.bf16.msra.mxu0 %v951
    %992 = vmatprep.subr.bf16.mxu0 0
    %993 = vmatpush1.bf16.msra.mxu0 %v952
    %994 = vmatprep.subr.bf16.mxu0 0
    %995 = vmatpush1.bf16.msra.mxu0 %v953
    %996 = vmatprep.subr.bf16.mxu0 0
    %997 = vmatpush1.bf16.msra.mxu0 %v954
    %998 = vmatprep.subr.bf16.mxu0 0
    %999 = vmatpush1.bf16.msra.mxu0 %v955
    %1000 = vmatprep.subr.bf16.mxu0 0
    %1001 = vmatpush1.bf16.msra.mxu0 %v956
    %1002 = vmatprep.subr.bf16.mxu0 0
    %1003 = vmatpush1.bf16.msra.mxu0 %v957
    %1004 = vmatprep.subr.bf16.mxu0 0
    %1005 = vmatpush1.bf16.msra.mxu0 %v958
    %1006 = vmatprep.subr.bf16.mxu0 0
    %1007 = vmatpush1.bf16.msra.mxu0 %v959
    %1008 = vmatprep.mubr.bf16.mxu0 %v826
    %1009 = vmatmul.mubr.bf16.gmra.mrb[0].mxu0 %v825
    %v1010 = vpop.f32.mrb[0].mxu0
    %v1011 = vadd.f32 %v878, %v1010
    %v1012 = vpop.f32.mrb[0].mxu0
    %v1013 = vpop.f32.mrb[0].mxu0
    %v1014 = vadd.f32 %v878, %v1013
    %v1015 = vpop.f32.mrb[0].mxu0
    %1016 = vmatprep.mubr.bf16.mxu0 %v828
    %1017 = vmatmul.mubr.bf16.gmra.mrb[0].mxu0 %v827
    %v1018 = vpop.f32.mrb[0].mxu0
    %v1019 = vadd.f32 %v878, %v1018
    %v1020 = vpop.f32.mrb[0].mxu0
    %v1021 = vpop.f32.mrb[0].mxu0
    %v1022 = vadd.f32 %v878, %v1021
    %v1023 = vpop.f32.mrb[0].mxu0
    %1024 = vmatprep.mubr.bf16.mxu0 %v830
    %1025 = vmatmul.mubr.bf16.gmra.mrb[0].mxu0 %v829
    %v1026 = vpop.f32.mrb[0].mxu0
    %v1027 = vadd.f32 %v878, %v1026
    %v1028 = vpop.f32.mrb[0].mxu0
    %v1029 = vpop.f32.mrb[0].mxu0
    %v1030 = vadd.f32 %v878, %v1029
    %v1031 = vpop.f32.mrb[0].mxu0
    %1032 = vmatprep.mubr.bf16.mxu0 %v832
    %1033 = vmatmul.mubr.bf16.gmra.mrb[0].mxu0 %v831
    %v1034 = vpop.f32.mrb[0].mxu0
    %v1035 = vadd.f32 %v878, %v1034
    %v1036 = vpop.f32.mrb[0].mxu0
    %v1037 = vpop.f32.mrb[0].mxu0
    %v1038 = vadd.f32 %v878, %v1037
    %v1039 = vpop.f32.mrb[0].mxu0
    %1040 = vmatprep.mubr.bf16.mxu0 %v834
    %1041 = vmatmul.mubr.bf16.gmra.mrb[0].mxu0 %v833
    %v1042 = vpop.f32.mrb[0].mxu0
    %v1043 = vadd.f32 %v878, %v1042
    %v1044 = vpop.f32.mrb[0].mxu0
    %v1045 = vpop.f32.mrb[0].mxu0
    %v1046 = vadd.f32 %v878, %v1045
    %v1047 = vpop.f32.mrb[0].mxu0
    %1048 = vmatprep.mubr.bf16.mxu0 %v836
    %1049 = vmatmul.mubr.bf16.gmra.mrb[0].mxu0 %v835
    %v1050 = vpop.f32.mrb[0].mxu0
    %v1051 = vadd.f32 %v878, %v1050
    %v1052 = vpop.f32.mrb[0].mxu0
    %v1053 = vpop.f32.mrb[0].mxu0
    %v1054 = vadd.f32 %v878, %v1053
    %v1055 = vpop.f32.mrb[0].mxu0
    %1056 = vmatprep.mubr.bf16.mxu0 %v838
    %1057 = vmatmul.mubr.bf16.gmra.mrb[0].mxu0 %v837
    %v1058 = vpop.f32.mrb[0].mxu0
    %v1059 = vadd.f32 %v878, %v1058
    %v1060 = vpop.f32.mrb[0].mxu0
    %v1061 = vpop.f32.mrb[0].mxu0
    %v1062 = vadd.f32 %v878, %v1061
    %v1063 = vpop.f32.mrb[0].mxu0
    %1064 = vmatprep.mubr.bf16.mxu0 %v840
    %1065 = vmatmul.mubr.bf16.gmra.mrb[0].mxu0 %v839
    %v1066 = vpop.f32.mrb[0].mxu0
    %v1067 = vadd.f32 %v878, %v1066
    %v1068 = vpop.f32.mrb[0].mxu0
    %v1069 = vpop.f32.mrb[0].mxu0
    %v1070 = vadd.f32 %v878, %v1069
    %v1071 = vpop.f32.mrb[0].mxu0
    %1072 = vdwg.mxu0
    %v1073 = vadd.f32 %v1011, %v69
    %v1074 = vadd.f32 %v1014, %v70
    %v1075 = vadd.f32 %v1019, %v71
    %v1076 = vadd.f32 %v1022, %v72
    %v1077 = vadd.f32 %v1027, %v73
    %v1078 = vadd.f32 %v1030, %v74
    %v1079 = vadd.f32 %v1035, %v75
    %v1080 = vadd.f32 %v1038, %v76
    %v1081 = vadd.f32 %v1043, %v77
    %v1082 = vadd.f32 %v1046, %v78
    %v1083 = vadd.f32 %v1051, %v79
    %v1084 = vadd.f32 %v1054, %v80
    %v1085 = vadd.f32 %v1059, %v81
    %v1086 = vadd.f32 %v1062, %v82
    %v1087 = vadd.f32 %v1067, %v83
    %v1088 = vadd.f32 %v1070, %v84
    %1089 = vst [vmem:[#allocation8] sm:$0xff] %v1073
    %1090 = vst [vmem:[#allocation8 + $0x8] sm:$0xff] %v1074
    %1091 = vst [vmem:[#allocation8 + $0x10] sm:$0xff] %v1075
    %1092 = vst [vmem:[#allocation8 + $0x18] sm:$0xff] %v1076
    %1093 = vst [vmem:[#allocation8 + $0x20] sm:$0xff] %v1077
    %1094 = vst [vmem:[#allocation8 + $0x28] sm:$0xff] %v1078
    %1095 = vst [vmem:[#allocation8 + $0x30] sm:$0xff] %v1079
    %1096 = vst [vmem:[#allocation8 + $0x38] sm:$0xff] %v1080
    %1097 = vst [vmem:[#allocation8 + $0x40] sm:$0xff] %v1081
    %1098 = vst [vmem:[#allocation8 + $0x48] sm:$0xff] %v1082
    %1099 = vst [vmem:[#allocation8 + $0x50] sm:$0xff] %v1083
    %1100 = vst [vmem:[#allocation8 + $0x58] sm:$0xff] %v1084
    %1101 = vst [vmem:[#allocation8 + $0x60] sm:$0xff] %v1085
    %1102 = vst [vmem:[#allocation8 + $0x68] sm:$0xff] %v1086
    %1103 = vst [vmem:[#allocation8 + $0x70] sm:$0xff] %v1087
    %1104 = vst [vmem:[#allocation8 + $0x78] sm:$0xff] %v1088
    // Predicated region
    $region42: #{tpu_custom_call.1} parent=1 // pred_check
      _
    $region43: #{tpu_custom_call.1} parent=1 // pred_check_branch
      %1106 = sbr.rel (0) target = $region45
    $region44: #{tpu_custom_call.1} parent=1 // pred_region
      %s1108 = ssub.s32 2048, 2048
      %1109 = vsyncadd [#allocation4], %s1108
      %s1110 = sshll.u32 [#allocation8], 4
      %s1111 = int_to_ptr.vmem [resolvable:$true] %s1110
      %1116 = dma.vmem_to_hbm [thread:$0]  %s1111, 2048, %s7, [#allocation4], 128, 128, 8
    $region45: #{tpu_custom_call.1} parent=1 // pred_fallthru
      _
    // Predicated region
    $region46: #{tpu_custom_call.1} parent=1 // pred_check
      _
    $region47: #{tpu_custom_call.1} parent=1 // pred_check_branch
      %1118 = sbr.rel (0) target = $region49
    $region48: #{tpu_custom_call.1} parent=1 // pred_region
      %1119 = dma.done [#allocation4], 2048
    $region49: #{tpu_custom_call.1} parent=1 // pred_fallthru
      _
    %1120 = vsyncpa [#allocation3], 1
    %1121 = vsyncpa [#allocation6], 1
    %1122 = vsyncpa [#allocation4], 1

</llo_original>
